<compile_context>
chip_gen: v6e
topology: v6e:2x2x1
jax: 0.10.0
libtpu: 0.0.40
codegen_flags: <defaults>
</compile_context>

<pallas_src>
import functools

import jax
import jax.numpy as jnp
from jax.experimental import pallas as pl
from jax.experimental.pallas import tpu as pltpu


def _round_up(x, m):
    return ((x + m - 1) // m) * m


def _tpu_vmem_and_cores():
    """Best-effort hardware query: (physical VMEM bytes, #TensorCores/chip).

    Falls back to the most conservative assumption (v7x: 64 MiB VMEM, 2 TCs)
    if the query or the field names are unavailable.  Defaulting to 2 cores
    only costs one extra ~0.35 us grid step on single-TC chips, while
    defaulting to 1 core could leave a v7x TensorCore idle.
    """
    vmem_bytes = 64 * 1024 * 1024
    num_cores = 2
    try:
        info = pltpu.get_tpu_info()
        for name in ("vmem_capacity_bytes", "vmem_bytes", "vmem_capacity"):
            v = getattr(info, name, None)
            if v:
                vmem_bytes = int(v)
                break
        for name in ("num_cores", "core_count", "tensorcore_count",
                     "num_tensorcores"):
            c = getattr(info, name, None)
            if c:
                num_cores = int(c)
                break
    except Exception:
        pass
    return vmem_bytes, num_cores


def _tile_vmem_bytes(tm, tn, K, in_itemsize, out_itemsize):
    """VMEM footprint of one grid step (3 weight buffers, 2 for the rest)."""
    x_bytes = tm * K * in_itemsize
    w_bytes = K * tn * in_itemsize
    b_bytes = tn * 4
    o_bytes = tm * tn * out_itemsize
    return 2 * (x_bytes + b_bytes + o_bytes) + 3 * w_bytes


def _pick_tile_n(N, K, tm, in_itemsize, out_itemsize, budget, num_cores):
    """Pick the N tile (multiple of 128, divides N, fits the VMEM budget).

    Preferences, in order:
      * tn >= 256 so each strided weight-DMA row chunk is >= 512 B in bf16
        (v5e HBM-BW efficiency);
      * on multi-TensorCore chips (v7x): >= 2 N-steps and a step count that
        is a multiple of the core count so the "parallel" N axis shards the
        weight stream evenly across cores;
      * otherwise: the largest fitting tile (fewest per-step overheads).
    """
    assert N % 128 == 0, "llm_hidden_size must be a multiple of 128"
    cands = [t for t in range(128, N + 1, 128) if N % t == 0]
    fitting = [t for t in cands
               if _tile_vmem_bytes(tm, t, K, in_itemsize, out_itemsize) <= budget]
    if not fitting:
        return 128
    pref = [t for t in fitting if t >= 256] or fitting
    pref = sorted(pref, reverse=True)
    if num_cores >= 2:
        even = [t for t in pref if (N // t) >= 2 and (N // t) % num_cores == 0]
        if even:
            return even[0]
        multi = [t for t in pref if (N // t) >= 2]
        if multi:
            return multi[0]
    return pref[0]


def _weight_block_spec(K, tn, n_steps):
    idx = lambda j, i: (0, j)
    if n_steps >= 4:
        # Many short steps: deepen the weight pipeline so the DMA queue stays
        # full across step boundaries.
        try:
            return pl.BlockSpec((K, tn), idx, pipeline_mode=pl.Buffered(3))
        except Exception:
            pass
    return pl.BlockSpec((K, tn), idx)


def _linear_kernel(x_ref, w_ref, b_ref, o_ref):
    # x_ref: (tm, K) bf16 row tile, w_ref: (K, tn) bf16 weight column tile,
    # b_ref: (1, tn) f32 bias tile, o_ref: (tm, tn) output tile.
    acc = jnp.dot(x_ref[...], w_ref[...], preferred_element_type=jnp.float32)
    o_ref[...] = (acc + b_ref[...]).astype(o_ref.dtype)


def prepare_llm_proj_params(weight_kn, bias, compute_dtype=jnp.bfloat16):
    """One-time (outside jit) cast of the projection parameters.

    Hoists the f32->bf16 weight convert out of the per-call path: the kernel
    is bound by the HBM DMA of W, so converting per call ~4x's its traffic.
    """
    return (jnp.asarray(weight_kn, dtype=compute_dtype),
            jnp.asarray(bias, dtype=jnp.float32).reshape(1, -1))


@functools.partial(
    jax.jit, static_argnames=("compute_dtype", "out_dtype", "tile_m", "tile_n"))
def llm_proj_pallas(query_embeds, weight_kn, bias, *,
                    compute_dtype=jnp.bfloat16, out_dtype=None,
                    tile_m=None, tile_n=None):
    """Pallas implementation of nn.Linear(qformer_hidden, llm_hidden).

    query_embeds: [B, T, K]
    weight_kn:    [K, N]   (== torch weight.T); pass it pre-cast to
                  `compute_dtype` (see prepare_llm_proj_params) so the cast
                  is not re-done per call.
    bias:         [N] or [1, N]
    returns:      [B, T, N] in `out_dtype` (default: query_embeds.dtype).
    """
    B, T, K = query_embeds.shape
    Kw, N = weight_kn.shape
    assert K == Kw

    if out_dtype is None:
        out_dtype = query_embeds.dtype
    in_itemsize = jnp.dtype(compute_dtype).itemsize
    out_itemsize = jnp.dtype(out_dtype).itemsize

    # --- hardware-aware VMEM budget ------------------------------------------
    vmem_cap, num_cores = _tpu_vmem_and_cores()
    scoped_vmem = min(int(vmem_cap * 3 // 4), 96 * 1024 * 1024)
    budget = int(scoped_vmem * 0.9)

    # --- tiling ---------------------------------------------------------------
    M = B * T
    # Keep the full (tiny) M resident when possible; multiple of 16 for bf16
    # sublane packing.
    tm = tile_m if tile_m is not None else min(512, _round_up(M, 16))
    assert tm % 8 == 0
    M_pad = _round_up(M, tm)
    tn = tile_n if tile_n is not None else _pick_tile_n(
        N, K, tm, in_itemsize, out_itemsize, budget, num_cores)
    assert N % tn == 0 and tn % 128 == 0
    n_steps = N // tn
    m_steps = M_pad // tm

    # --- inputs (bf16 compute path, f32 bias / accumulate) --------------------
    x2d = query_embeds.reshape(M, K).astype(compute_dtype)
    if M_pad != M:
        x2d = jnp.pad(x2d, ((0, M_pad - M), (0, 0)))
    w = weight_kn.astype(compute_dtype)          # no-op if pre-cast
    b2d = bias.reshape(1, N).astype(jnp.float32)  # no-op if pre-cast

    # Grid: N outer, M inner => W block index is constant across the inner M
    # loop, so W streams from HBM exactly once; only the tiny X tile repeats.
    grid = (n_steps, m_steps)

    cost = pl.CostEstimate(
        flops=2 * M_pad * K * N,
        transcendentals=0,
        bytes_accessed=(n_steps * M_pad * K * in_itemsize   # X per N step
                        + K * N * in_itemsize               # W exactly once
                        + N * 4                             # bias
                        + M_pad * N * out_itemsize),        # output
    )

    out = pl.pallas_call(
        _linear_kernel,
        out_shape=jax.ShapeDtypeStruct((M_pad, N), out_dtype),
        grid_spec=pltpu.PrefetchScalarGridSpec(
            num_scalar_prefetch=0,
            grid=grid,
            in_specs=[
                pl.BlockSpec((tm, K), lambda j, i: (i, 0)),   # X row tile
                _weight_block_spec(K, tn, n_steps),           # W column tile
                pl.BlockSpec((1, tn), lambda j, i: (0, j)),   # bias tile
            ],
            out_specs=pl.BlockSpec((tm, tn), lambda j, i: (i, j)),
        ),
        compiler_params=pltpu.CompilerParams(
            dimension_semantics=("parallel", "parallel"),
            vmem_limit_bytes=scoped_vmem,
        ),
        cost_estimate=cost,
    )(x2d, w, b2d)

    if M_pad != M:
        out = out[:M]
    return out.reshape(B, T, N)


def init_llm_proj_params(key, qformer_hidden_size, llm_hidden_size):
    """Deterministic init matching nn.Linear's shapes (uniform +/- 1/sqrt(K))."""
    k_w, k_b = jax.random.split(key)
    bound = 1.0 / jnp.sqrt(qformer_hidden_size)
    # PyTorch stores weight as [N, K]; we keep the transposed [K, N] layout.
    weight_kn = jax.random.uniform(
        k_w, (qformer_hidden_size, llm_hidden_size),
        minval=-bound, maxval=bound, dtype=jnp.float32)
    bias = jax.random.uniform(
        k_b, (llm_hidden_size,), minval=-bound, maxval=bound, dtype=jnp.float32)
    return weight_kn, bias


def _reference(query_embeds, weight_kn, bias):
    B, T, K = query_embeds.shape
    N = weight_kn.shape[1]
    ref = query_embeds.reshape(B * T, K) @ weight_kn + bias.reshape(1, N)
    return ref.reshape(B, T, N)


if __name__ == "__main__":
    key = jax.random.PRNGKey(0)

    # ---- Test 1: single-tile fast path (module-consistent small shapes) -----
    B, T, K, N = 2, 8, 128, 256
    k_x, k_p, key = jax.random.split(key, 3)
    query_embeds = jax.random.normal(k_x, (B, T, K), dtype=jnp.float32)
    weight_kn, bias = init_llm_proj_params(k_p, K, N)
    # One-time parameter cast, OUTSIDE the per-call jitted path.
    w_bf16, b_f32 = prepare_llm_proj_params(weight_kn, bias)

    out1 = llm_proj_pallas(query_embeds, w_bf16, b_f32)
    out1 = jax.block_until_ready(out1)
    ref1 = _reference(query_embeds, weight_kn, bias)
    assert out1.shape == (B, T, N)
    assert out1.dtype == query_embeds.dtype
    assert jnp.allclose(out1, ref1, atol=3e-2, rtol=3e-2), "test1 mismatch"

    # ---- Test 2: multi-step N pipeline + M padding/slicing path --------------
    B2, T2, K2, N2 = 2, 20, 192, 1024
    k_x2, k_p2, key = jax.random.split(key, 3)
    query_embeds2 = jax.random.normal(k_x2, (B2, T2, K2), dtype=jnp.float32)
    weight_kn2, bias2 = init_llm_proj_params(k_p2, K2, N2)
    w2_bf16, b2_f32 = prepare_llm_proj_params(weight_kn2, bias2)

    # Force small tiles so the N-outer grid, deeper weight buffering, and the
    # M padding + final slice are actually exercised.
    out2 = llm_proj_pallas(query_embeds2, w2_bf16, b2_f32,
                           tile_m=16, tile_n=256)
    out2 = jax.block_until_ready(out2)
    ref2 = _reference(query_embeds2, weight_kn2, bias2)
    assert out2.shape == (B2, T2, N2)
    assert jnp.allclose(out2, ref2, atol=3e-2, rtol=3e-2), "test2 mismatch"

    print("KERNEL_OK")
</pallas_src>

<mosaic_0001>
module attributes {stable_mosaic.version = 11 : i64} {
  func.func @_linear_kernel(%arg0: i32, %arg1: i32, %arg2: memref<16x128xbf16, #tpu.memory_space<vmem>>, %arg3: memref<128x256xbf16, #tpu.memory_space<vmem>>, %arg4: memref<1x256xf32, #tpu.memory_space<vmem>>, %arg5: memref<16x256xf32, #tpu.memory_space<vmem>>) attributes {dimension_semantics = [#tpu.dimension_semantics<parallel>, #tpu.dimension_semantics<parallel>], iteration_bounds = array<i64: 1, 1>, scalar_prefetch = 0 : i64, scratch_operands = 0 : i64, tpu.core_type = #tpu.core_type<tc>, window_params = [{transform_indices = @transform_0, window_bounds = array<i64: 16, 128>}, {transform_indices = @transform_1, window_bounds = array<i64: 128, 256>}, {transform_indices = @transform_2, window_bounds = array<i64: 1, 256>}, {transform_indices = @transform_3, window_bounds = array<i64: 16, 256>}]} {
    %c0 = arith.constant 0 : index
    %c0_0 = arith.constant 0 : index
    %0 = vector.load %arg2[%c0, %c0_0] : memref<16x128xbf16, #tpu.memory_space<vmem>>, vector<16x128xbf16>
    %c0_1 = arith.constant 0 : index
    %c0_2 = arith.constant 0 : index
    %1 = vector.load %arg3[%c0_1, %c0_2] : memref<128x256xbf16, #tpu.memory_space<vmem>>, vector<128x256xbf16>
    %cst = arith.constant dense<0.000000e+00> : vector<16x256xf32>
    %2 = tpu.matmul %0, %1, %cst {dimension_numbers = #tpu.dot_dimension_numbers<[1], [0], [0], [1], [0, 0, 1, 1], [], []>} : vector<16x128xbf16>, vector<128x256xbf16>, vector<16x256xf32> -> vector<16x256xf32>
    %c0_3 = arith.constant 0 : index
    %c0_4 = arith.constant 0 : index
    %3 = vector.load %arg4[%c0_3, %c0_4] : memref<1x256xf32, #tpu.memory_space<vmem>>, vector<1x256xf32>
    %4 = vector.broadcast %3 : vector<1x256xf32> to vector<16x256xf32>
    %5 = arith.addf %2, %4 : vector<16x256xf32>
    %c0_5 = arith.constant 0 : index
    %c0_6 = arith.constant 0 : index
    %6 = vector.load %arg5[%c0_5, %c0_6] : memref<16x256xf32, #tpu.memory_space<vmem>>, vector<16x256xf32>
    tpu.vector_store %arg5[%c0_5, %c0_6], %5 {strides = array<i32>} : memref<16x256xf32, #tpu.memory_space<vmem>>, vector<16x256xf32>,
    return
  }
  func.func @transform_0(%arg0: i32, %arg1: i32) -> (i32, i32) {
    %c0_i32 = arith.constant 0 : i32
    %c0_i32_0 = arith.constant 0 : i32
    return %arg1, %c0_i32 : i32, i32
  }
  func.func @transform_1(%arg0: i32, %arg1: i32) -> (i32, i32) {
    %c0_i32 = arith.constant 0 : i32
    %c0_i32_0 = arith.constant 0 : i32
    return %c0_i32, %arg0 : i32, i32
  }
  func.func @transform_2(%arg0: i32, %arg1: i32) -> (i32, i32) {
    %c0_i32 = arith.constant 0 : i32
    %c0_i32_0 = arith.constant 0 : i32
    return %c0_i32, %arg0 : i32, i32
  }
  func.func @transform_3(%arg0: i32, %arg1: i32) -> (i32, i32) {
    %c0_i32 = arith.constant 0 : i32
    return %arg1, %arg0 : i32, i32
  }
}

</mosaic_0001>

<llo_original>
// kernel: llm_proj_pallas.1
$region0: #{llm_proj_pallas.1}
  #allocation0 [shape = 'u32[]', space=smem, size = 0x4, offset = 0x4, fixed_abs, tag = 'smem constant byte address 0x4 - core index']
  #allocation1 [shape = 'u32[144,128]{1,0:T(1,128)}', space=vmem, size = 0x12000, scoped, tag = 'internal scratch']
  %s0 = inlined_call_operand.vmem [shape: bf16[16,128], index: 0, kind: input, shape index: {}]
  %s1 = inlined_call_operand.hbm [shape: bf16[128,256], index: 1, kind: input, shape index: {}]
  %s2 = inlined_call_operand.vmem [shape: f32[1,256], index: 2, kind: input, shape index: {}]
  %s3 = inlined_call_operand.hbm [shape: f32[16,256], index: 3, kind: output, shape index: {}]
  %s4 = sld [smem:[#allocation0]]
  $region26: #{llm_proj_pallas.1} parent=0
    _
  %s6 = ssub.s32 1, %s4
  %s7 = scalar_select 0, %s6, %s4
  $region1: #{llm_proj_pallas.1} parent=0
    #allocation2 [shape = 'u8[65536]{0}', space=vmem, size = 0x10000, scoped, tag = 'input window, operand 1, single buffered']
    #allocation3 [shape = 's32[1]{0}', space=sflag, size = 0x4, scoped, tag = 'scoped memory for llm_proj_pallas.1']
    #allocation4 [shape = 's32[1]{0}', space=sflag, size = 0x4, scoped, tag = 'scoped memory for llm_proj_pallas.1']
    #allocation5 [shape = 'u8[16384]{0}', space=vmem, size = 0x4000, scoped, tag = 'output window, operand 0, single buffered']
    %8 = vsyncpa [#allocation3], 0
    %9 = vsyncpa [#allocation4], 0
    // Predicated region
    $region2: #{llm_proj_pallas.1} parent=1 // pred_check
      _
    $region3: #{llm_proj_pallas.1} parent=1 // pred_check_branch
      %11 = sbr.rel (0) target = $region5
    $region4: #{llm_proj_pallas.1} parent=1 // pred_region
      _
    $region5: #{llm_proj_pallas.1} parent=1 // pred_fallthru
      _
    // Predicated region
    $region6: #{llm_proj_pallas.1} parent=1 // pred_check
      _
    $region7: #{llm_proj_pallas.1} parent=1 // pred_check_branch
      %13 = sbr.rel (0) target = $region9
    $region8: #{llm_proj_pallas.1} parent=1 // pred_region
      %s15 = ssub.s32 2048, 2048
      %16 = vsyncadd [#allocation3], %s15
      %s17 = sshll.u32 [#allocation2], 4
      %s18 = int_to_ptr.vmem [resolvable:$true] %s17
      %23 = dma.hbm_to_vmem [thread:$0]  %s1, 2048, %s18, [#allocation3], 128, 128, 8
    $region9: #{llm_proj_pallas.1} parent=1 // pred_fallthru
      _
    // Predicated region
    $region10: #{llm_proj_pallas.1} parent=1 // pred_check
      _
    $region11: #{llm_proj_pallas.1} parent=1 // pred_check_branch
      %25 = sbr.rel (0) target = $region13
    $region12: #{llm_proj_pallas.1} parent=1 // pred_region
      _
    $region13: #{llm_proj_pallas.1} parent=1 // pred_fallthru
      _
    // Predicated region
    $region14: #{llm_proj_pallas.1} parent=1 // pred_check
      _
    $region15: #{llm_proj_pallas.1} parent=1 // pred_check_branch
      %27 = sbr.rel (0) target = $region17
    $region16: #{llm_proj_pallas.1} parent=1 // pred_region
      %28 = dma.done [#allocation3], 2048
    $region17: #{llm_proj_pallas.1} parent=1 // pred_fallthru
      _
    %v30 = vld [vmem:[%s0] sm:$0xf]
    %v31 = vld [vmem:[%s0 + $0x4] sm:$0xf]
    %v32 = vld [vmem:[#allocation2] sm:$0xff]
    %v33 = vld [vmem:[#allocation2 + $0x8] sm:$0xff]
    %v34 = vld [vmem:[#allocation2 + $0x10] sm:$0xff]
    %v35 = vld [vmem:[#allocation2 + $0x18] sm:$0xff]
    %v36 = vld [vmem:[#allocation2 + $0x20] sm:$0xff]
    %v37 = vld [vmem:[#allocation2 + $0x28] sm:$0xff]
    %v38 = vld [vmem:[#allocation2 + $0x30] sm:$0xff]
    %v39 = vld [vmem:[#allocation2 + $0x38] sm:$0xff]
    %v40 = vld [vmem:[#allocation2 + $0x40] sm:$0xff]
    %v41 = vld [vmem:[#allocation2 + $0x48] sm:$0xff]
    %v42 = vld [vmem:[#allocation2 + $0x50] sm:$0xff]
    %v43 = vld [vmem:[#allocation2 + $0x58] sm:$0xff]
    %v44 = vld [vmem:[#allocation2 + $0x60] sm:$0xff]
    %v45 = vld [vmem:[#allocation2 + $0x68] sm:$0xff]
    %v46 = vld [vmem:[#allocation2 + $0x70] sm:$0xff]
    %v47 = vld [vmem:[#allocation2 + $0x78] sm:$0xff]
    %v48 = vld [vmem:[%s2] sm:$0x3]
    %v50 = vlaneseq
    %v51 = vshrl.u32 %v50, 7
    %v52 = vsub.s32 0, %v51
    %v53 = vrot.slane %v48, %v52
    %v54 = vlaneseq
    %v55 = vshrl.u32 %v54, 7
    %v56 = vsub.s32 1, %v55
    %v57 = vrot.slane %v48, %v56
    %v62 = vunpack.c.l.b16 %v30
    %v63 = vunpack.c.l.b16 %v31
    %v64 = vpack.c.b16 %v63, %v62
    %v82 = vunpack.c.l.b16 %v32
    %v83 = vunpack.c.h.b16 %v32
    %v84 = vunpack.c.l.b16 %v33
    %v85 = vunpack.c.h.b16 %v33
    %v86 = vunpack.c.l.b16 %v34
    %v87 = vunpack.c.h.b16 %v34
    %v88 = vunpack.c.l.b16 %v35
    %v89 = vunpack.c.h.b16 %v35
    %v90 = vunpack.c.l.b16 %v36
    %v91 = vunpack.c.h.b16 %v36
    %v92 = vunpack.c.l.b16 %v37
    %v93 = vunpack.c.h.b16 %v37
    %v94 = vunpack.c.l.b16 %v38
    %v95 = vunpack.c.h.b16 %v38
    %v96 = vunpack.c.l.b16 %v39
    %v97 = vunpack.c.h.b16 %v39
    %v98 = vunpack.c.l.b16 %v40
    %v99 = vunpack.c.h.b16 %v40
    %v100 = vunpack.c.l.b16 %v41
    %v101 = vunpack.c.h.b16 %v41
    %v102 = vunpack.c.l.b16 %v42
    %v103 = vunpack.c.h.b16 %v42
    %v104 = vunpack.c.l.b16 %v43
    %v105 = vunpack.c.h.b16 %v43
    %v106 = vunpack.c.l.b16 %v44
    %v107 = vunpack.c.h.b16 %v44
    %v108 = vunpack.c.l.b16 %v45
    %v109 = vunpack.c.h.b16 %v45
    %v110 = vunpack.c.l.b16 %v46
    %v111 = vunpack.c.h.b16 %v46
    %v112 = vunpack.c.l.b16 %v47
    %v113 = vunpack.c.h.b16 %v47
    %v114 = vpack.c.b16 %v84, %v82
    %v115 = vpack.c.b16 %v85, %v83
    %v116 = vpack.c.b16 %v88, %v86
    %v117 = vpack.c.b16 %v89, %v87
    %v118 = vpack.c.b16 %v92, %v90
    %v119 = vpack.c.b16 %v93, %v91
    %v120 = vpack.c.b16 %v96, %v94
    %v121 = vpack.c.b16 %v97, %v95
    %v122 = vpack.c.b16 %v100, %v98
    %v123 = vpack.c.b16 %v101, %v99
    %v124 = vpack.c.b16 %v104, %v102
    %v125 = vpack.c.b16 %v105, %v103
    %v126 = vpack.c.b16 %v108, %v106
    %v127 = vpack.c.b16 %v109, %v107
    %v128 = vpack.c.b16 %v112, %v110
    %v129 = vpack.c.b16 %v113, %v111
    %146 = vmatprep.subr.bf16.mxu0 %v129
    %147 = vmatpush1.bf16.msra.mxu0 %v128
    %148 = vmatprep.subr.bf16.mxu0 %v127
    %149 = vmatpush1.bf16.msra.mxu0 %v126
    %150 = vmatprep.subr.bf16.mxu0 %v125
    %151 = vmatpush1.bf16.msra.mxu0 %v124
    %152 = vmatprep.subr.bf16.mxu0 %v123
    %153 = vmatpush1.bf16.msra.mxu0 %v122
    %154 = vmatprep.subr.bf16.mxu0 %v121
    %155 = vmatpush1.bf16.msra.mxu0 %v120
    %156 = vmatprep.subr.bf16.mxu0 %v119
    %157 = vmatpush1.bf16.msra.mxu0 %v118
    %158 = vmatprep.subr.bf16.mxu0 %v117
    %159 = vmatpush1.bf16.msra.mxu0 %v116
    %160 = vmatprep.subr.bf16.mxu0 %v115
    %161 = vmatpush1.bf16.msra.mxu0 %v114
    %162 = vmatprep.subr.bf16.mxu0 0
    %163 = vmatpush2.bf16.msra.mxu0 0
    %164 = vmatprep.subr.bf16.mxu0 0
    %165 = vmatpush2.bf16.msra.mxu0 0
    %166 = vmatprep.subr.bf16.mxu0 0
    %167 = vmatpush2.bf16.msra.mxu0 0
    %168 = vmatprep.subr.bf16.mxu0 0
    %169 = vmatpush2.bf16.msra.mxu0 0
    %170 = vmatprep.subr.bf16.mxu0 0
    %171 = vmatpush2.bf16.msra.mxu0 0
    %172 = vmatprep.subr.bf16.mxu0 0
    %173 = vmatpush2.bf16.msra.mxu0 0
    %174 = vmatprep.subr.bf16.mxu0 0
    %175 = vmatpush2.bf16.msra.mxu0 0
    %176 = vmatprep.subr.bf16.mxu0 0
    %177 = vmatpush2.bf16.msra.mxu0 0
    %178 = vmatprep.mubr.bf16.mxu0 0
    %179 = vmatmul.mubr.bf16.gmra.mxu0 %v64
    %v180 = vpop.f32.mrf.mxu0
    %v181 = vadd.f32 %v53, %v180
    %v182 = vpop.f32.mrf.mxu0
    %v183 = vadd.f32 %v57, %v182
    %v184 = vpop.f32.mrf.mxu0
    %v185 = vadd.f32 %v53, %v184
    %v186 = vpop.f32.mrf.mxu0
    %v187 = vadd.f32 %v57, %v186
    %188 = vdwg.mxu0
    %189 = vst [vmem:[#allocation5] sm:$0xff] %v181
    %190 = vst [vmem:[#allocation5 + $0x8] sm:$0xff] %v183
    %191 = vst [vmem:[#allocation5 + $0x10] sm:$0xff] %v185
    %192 = vst [vmem:[#allocation5 + $0x18] sm:$0xff] %v187
    // Predicated region
    $region18: #{llm_proj_pallas.1} parent=1 // pred_check
      _
    $region19: #{llm_proj_pallas.1} parent=1 // pred_check_branch
      %194 = sbr.rel (0) target = $region21
    $region20: #{llm_proj_pallas.1} parent=1 // pred_region
      %s196 = ssub.s32 512, 512
      %197 = vsyncadd [#allocation4], %s196
      %s198 = sshll.u32 [#allocation5], 4
      %s199 = int_to_ptr.vmem [resolvable:$true] %s198
      %204 = dma.vmem_to_hbm [thread:$0]  %s199, 512, %s3, [#allocation4], 256, 256, 16
    $region21: #{llm_proj_pallas.1} parent=1 // pred_fallthru
      _
    // Predicated region
    $region22: #{llm_proj_pallas.1} parent=1 // pred_check
      _
    $region23: #{llm_proj_pallas.1} parent=1 // pred_check_branch
      %206 = sbr.rel (0) target = $region25
    $region24: #{llm_proj_pallas.1} parent=1 // pred_region
      %207 = dma.done [#allocation4], 512
    $region25: #{llm_proj_pallas.1} parent=1 // pred_fallthru
      _
    %208 = vsyncpa [#allocation3], 1
    %209 = vsyncpa [#allocation4], 1

</llo_original>
